<compile_context>
chip_gen: v7x
topology: tpu7x:2x2x1
jax: 0.10.0
libtpu: 0.0.40
codegen_flags: <defaults>
</compile_context>

<pallas_src>
import functools
import math

import jax
import jax.numpy as jnp
from jax import lax
from jax.experimental import pallas as pl
from jax.experimental.pallas import tpu as pltpu


def _round_up(x, m):
    return ((x + m - 1) // m) * m


def _row_block(n, cap=512):
    """Largest row-tile <= cap that divides n (n is always a multiple of 8)."""
    for bn in (cap, 256, 128, 64, 32, 16, 8):
        if bn <= n and n % bn == 0:
            return bn
    return n


# ----------------------------------------------------------------------------
# Pallas kernels
# ----------------------------------------------------------------------------
def _proj1_kernel(x_ref, w_ref, b_ref, z_ref):
    """z = x @ w + b   (x:(bn,F), w:(F,G), b:(1,G))."""
    z_ref[...] = (jnp.dot(x_ref[...], w_ref[...],
                          preferred_element_type=jnp.float32)
                  + b_ref[...]).astype(z_ref.dtype)


def _proj2_kernel(xa_ref, xb_ref, wa_ref, wb_ref, b_ref, z_ref):
    """z = xa @ wa + xb @ wb + b.

    Equivalent to concat([xa, xb], -1) @ concat([wa, wb], 0) + b without ever
    materializing the feature concatenation in HBM.
    """
    z_ref[...] = (jnp.dot(xa_ref[...], wa_ref[...],
                          preferred_element_type=jnp.float32)
                  + jnp.dot(xb_ref[...], wb_ref[...],
                            preferred_element_type=jnp.float32)
                  + b_ref[...]).astype(z_ref.dtype)


def _bilstm_kernel(zx_ref, whh_f_ref, whh_b_ref, yf_ref, yb_ref,
                   hf_scr, cf_scr, hb_scr, cb_scr, *, hidden):
    """Fused forward+backward LSTM recurrence over a full sequence.

    The input projection is pre-computed (zx_ref); the serial loop only does
    the h @ W_hh recurrence and the gate nonlinearities for both directions.

    zx_ref    : (T, Bp, 8H)  [..., :4H] = fwd gate pre-acts, [..., 4H:] = bwd
    whh_*_ref : (H, 4H)      recurrent weights (pre-transposed)
    yf_ref    : (T, Bp, H)   forward hidden states
    yb_ref    : (T, Bp, H)   backward hidden states (already un-reversed)
    *_scr     : (Bp, H)      VMEM state carries
    """
    seq_len = zx_ref.shape[0]
    H = hidden

    hf_scr[...] = jnp.zeros_like(hf_scr)
    cf_scr[...] = jnp.zeros_like(cf_scr)
    hb_scr[...] = jnp.zeros_like(hb_scr)
    cb_scr[...] = jnp.zeros_like(cb_scr)

    def cell(z, c):
        # PyTorch gate order: i, f, g, o
        i_g = jax.nn.sigmoid(z[:, 0 * H:1 * H])
        f_g = jax.nn.sigmoid(z[:, 1 * H:2 * H])
        g_g = jnp.tanh(z[:, 2 * H:3 * H])
        o_g = jax.nn.sigmoid(z[:, 3 * H:4 * H])
        c_new = f_g * c + i_g * g_g
        h_new = o_g * jnp.tanh(c_new)
        return h_new, c_new

    def step(t, carry):
        tb = seq_len - 1 - t
        zrow_f = zx_ref[t]                       # (Bp, 8H)
        zrow_b = zx_ref[tb]                      # (Bp, 8H)
        zf = zrow_f[:, :4 * H] + jnp.dot(hf_scr[...], whh_f_ref[...],
                                         preferred_element_type=jnp.float32)
        zb = zrow_b[:, 4 * H:] + jnp.dot(hb_scr[...], whh_b_ref[...],
                                         preferred_element_type=jnp.float32)
        hf_new, cf_new = cell(zf, cf_scr[...])
        hb_new, cb_new = cell(zb, cb_scr[...])
        hf_scr[...] = hf_new
        cf_scr[...] = cf_new
        hb_scr[...] = hb_new
        cb_scr[...] = cb_new
        yf_ref[t] = hf_new.astype(yf_ref.dtype)
        yb_ref[tb] = hb_new.astype(yb_ref.dtype)
        return carry

    lax.fori_loop(0, seq_len, step, 0, unroll=2)


# ----------------------------------------------------------------------------
# Wrappers around pallas_call
# ----------------------------------------------------------------------------
def matmul_bias(x, w, b):
    """x:(N,F), w:(F,G), b:(1,G) -> (N,G), row-tiled."""
    N, F = x.shape
    G = w.shape[1]
    bn = _row_block(N)
    return pl.pallas_call(
        _proj1_kernel,
        out_shape=jax.ShapeDtypeStruct((N, G), jnp.float32),
        grid=(N // bn,),
        in_specs=[
            pl.BlockSpec((bn, F), lambda i: (i, 0)),
            pl.BlockSpec((F, G), lambda i: (0, 0)),
            pl.BlockSpec((1, G), lambda i: (0, 0)),
        ],
        out_specs=pl.BlockSpec((bn, G), lambda i: (i, 0)),
        compiler_params=pltpu.CompilerParams(dimension_semantics=("parallel",)),
    )(x, w, b)


def matmul2_bias(xa, xb, wa, wb, b):
    """Split-feature matmul: xa@wa + xb@wb + b, row-tiled."""
    N, Fa = xa.shape
    Fb = xb.shape[1]
    G = wa.shape[1]
    bn = _row_block(N)
    return pl.pallas_call(
        _proj2_kernel,
        out_shape=jax.ShapeDtypeStruct((N, G), jnp.float32),
        grid=(N // bn,),
        in_specs=[
            pl.BlockSpec((bn, Fa), lambda i: (i, 0)),
            pl.BlockSpec((bn, Fb), lambda i: (i, 0)),
            pl.BlockSpec((Fa, G), lambda i: (0, 0)),
            pl.BlockSpec((Fb, G), lambda i: (0, 0)),
            pl.BlockSpec((1, G), lambda i: (0, 0)),
        ],
        out_specs=pl.BlockSpec((bn, G), lambda i: (i, 0)),
        compiler_params=pltpu.CompilerParams(dimension_semantics=("parallel",)),
    )(xa, xb, wa, wb, b)


def bilstm_layer(zx, whh_f, whh_b):
    """zx:(T,Bp,8H) precomputed gate pre-acts -> (y_fwd, y_bwd) each (T,Bp,H)."""
    T, Bp, G8 = zx.shape
    H = whh_f.shape[0]
    kernel = functools.partial(_bilstm_kernel, hidden=H)
    # TODO(synk): for very long T the (T,Bp,8H) slab lives fully in VMEM; a
    # time-chunked pipeline (pltpu.emit_pipeline) would be needed on v7x.
    return pl.pallas_call(
        kernel,
        out_shape=(jax.ShapeDtypeStruct((T, Bp, H), jnp.float32),
                   jax.ShapeDtypeStruct((T, Bp, H), jnp.float32)),
        grid=(1,),
        in_specs=[
            pl.BlockSpec((T, Bp, G8), lambda i: (0, 0, 0)),
            pl.BlockSpec((H, 4 * H), lambda i: (0, 0)),
            pl.BlockSpec((H, 4 * H), lambda i: (0, 0)),
        ],
        out_specs=(pl.BlockSpec((T, Bp, H), lambda i: (0, 0, 0)),
                   pl.BlockSpec((T, Bp, H), lambda i: (0, 0, 0))),
        scratch_shapes=[pltpu.VMEM((Bp, H), jnp.float32)] * 4,
        compiler_params=pltpu.CompilerParams(dimension_semantics=("arbitrary",)),
    )(zx, whh_f, whh_b)


# ----------------------------------------------------------------------------
# Decoder module (parameter construction = glue; compute = Pallas kernels)
# ----------------------------------------------------------------------------
class Decoder:
    def __init__(self, embedding_dim, output_dim, dropout, lstm_layers, key):
        self.embedding_dim = embedding_dim
        self.output_dim = output_dim
        self.dropout = dropout          # TODO(synk): identity (inference semantics)
        self.num_layers = lstm_layers

        H = embedding_dim
        bound = 1.0 / math.sqrt(H)

        def uni(k, shape, bnd):
            return jax.random.uniform(k, shape, jnp.float32, -bnd, bnd)

        self.layers = []
        for layer in range(lstm_layers):
            d_in = H if layer == 0 else 2 * H
            dirs = []
            for _ in range(2):  # forward, backward
                key, k1, k2, k3, k4 = jax.random.split(key, 5)
                w_ih = uni(k1, (4 * H, d_in), bound).T            # (d_in, 4H)
                w_hh = uni(k2, (4 * H, H), bound).T               # (H, 4H)
                b = (uni(k3, (4 * H,), bound)
                     + uni(k4, (4 * H,), bound)).reshape(1, 4 * H)  # b_ih + b_hh
                dirs.append((w_ih, w_hh, b))
            (wih_f, whh_f, b_f), (wih_b, whh_b, b_b) = dirs
            # Both directions' input projections fused into one (d_in, 8H) matmul.
            w_ih_cat = jnp.concatenate([wih_f, wih_b], axis=1)    # (d_in, 8H)
            b_cat = jnp.concatenate([b_f, b_b], axis=1)           # (1, 8H)
            entry = dict(b=b_cat, whh_f=whh_f, whh_b=whh_b)
            if layer == 0:
                entry["w_ih"] = w_ih_cat
            else:
                # Pre-split along the (fwd_H | bwd_H) input-feature axis so the
                # previous layer's two output halves are never concatenated.
                entry["w_ih_a"] = w_ih_cat[:H]
                entry["w_ih_b"] = w_ih_cat[H:]
            self.layers.append(entry)

        key, k1, k2 = jax.random.split(key, 3)
        lin_bound = 1.0 / math.sqrt(2 * H)
        w_out = uni(k1, (output_dim, 2 * H), lin_bound).T         # (2H, O)
        b_out = uni(k2, (1, output_dim), lin_bound)
        # Lane-pad the head output so kernel stores are unmasked; wrapper slices back.
        self.o_pad = _round_up(output_dim, 128)
        w_pad = jnp.zeros((2 * H, self.o_pad), jnp.float32).at[:, :output_dim].set(w_out)
        self.w_out_a = w_pad[:H]
        self.w_out_b = w_pad[H:]
        self.b_out = jnp.zeros((1, self.o_pad), jnp.float32).at[:, :output_dim].set(b_out)

    def __call__(self, x):
        """x: (B, T, E) -> (B, T, output_dim)."""
        B, T, E = x.shape
        assert E == self.embedding_dim
        H = self.embedding_dim
        Bp = _round_up(B, 8)                                      # f32 sublane tile

        seq = jnp.transpose(x, (1, 0, 2)).astype(jnp.float32)     # (T, B, E)
        if Bp != B:
            seq = jnp.pad(seq, ((0, 0), (0, Bp - B), (0, 0)))
        N = T * Bp

        # Layer 0: hoisted input projection (one big matmul), then fused bi-LSTM.
        p0 = self.layers[0]
        zx = matmul_bias(seq.reshape(N, E), p0["w_ih"], p0["b"])
        yf, yb = bilstm_layer(zx.reshape(T, Bp, 8 * H), p0["whh_f"], p0["whh_b"])

        for layer in range(1, self.num_layers):
            p = self.layers[layer]
            # TODO(synk): training-mode inter-layer dropout omitted (identity).
            zx = matmul2_bias(yf.reshape(N, H), yb.reshape(N, H),
                              p["w_ih_a"], p["w_ih_b"], p["b"])
            yf, yb = bilstm_layer(zx.reshape(T, Bp, 8 * H), p["whh_f"], p["whh_b"])

        # Linear head on the (never-materialized) concat of fwd/bwd halves.
        out = matmul2_bias(yf.reshape(N, H), yb.reshape(N, H),
                           self.w_out_a, self.w_out_b, self.b_out)  # (N, o_pad)
        out = out.reshape(T, Bp, self.o_pad)[:, :B, :self.output_dim]
        return jnp.transpose(out, (1, 0, 2))                        # (B, T, O)


# ----------------------------------------------------------------------------
if __name__ == "__main__":
    key = jax.random.PRNGKey(0)
    k_params, k_x = jax.random.split(key)

    embedding_dim = 32
    output_dim = 16
    lstm_layers = 2
    dropout = 0.0
    batch, seq_len = 2, 8

    decoder = Decoder(embedding_dim, output_dim, dropout, lstm_layers, k_params)

    x = jax.random.normal(k_x, (batch, seq_len, embedding_dim), jnp.float32)
    out = jax.block_until_ready(decoder(x))

    assert out.shape == (batch, seq_len, output_dim), out.shape
    assert out.dtype == jnp.float32
    assert bool(jnp.all(jnp.isfinite(out)))
    print("KERNEL_OK")
</pallas_src>

<mosaic_0001>
module attributes {stable_mosaic.version = 11 : i64} {
  func.func @_proj1_kernel(%arg0: i32, %arg1: memref<64x32xf32, #tpu.memory_space<vmem>>, %arg2: memref<32x256xf32, #tpu.memory_space<vmem>>, %arg3: memref<1x256xf32, #tpu.memory_space<vmem>>, %arg4: memref<64x256xf32, #tpu.memory_space<vmem>>) attributes {dimension_semantics = [#tpu.dimension_semantics<parallel>], iteration_bounds = array<i64: 1>, scalar_prefetch = 0 : i64, scratch_operands = 0 : i64, tpu.core_type = #tpu.core_type<tc>, window_params = [{transform_indices = @transform_0, window_bounds = array<i64: 64, 32>}, {pipeline_mode = #tpu.pipeline_mode<synchronous>, transform_indices = @transform_1, window_bounds = array<i64: 32, 256>}, {pipeline_mode = #tpu.pipeline_mode<synchronous>, transform_indices = @transform_2, window_bounds = array<i64: 1, 256>}, {transform_indices = @transform_3, window_bounds = array<i64: 64, 256>}]} {
    %c0 = arith.constant 0 : index
    %c0_0 = arith.constant 0 : index
    %0 = vector.load %arg1[%c0, %c0_0] : memref<64x32xf32, #tpu.memory_space<vmem>>, vector<64x32xf32>
    %c0_1 = arith.constant 0 : index
    %c0_2 = arith.constant 0 : index
    %1 = vector.load %arg2[%c0_1, %c0_2] : memref<32x256xf32, #tpu.memory_space<vmem>>, vector<32x256xf32>
    %cst = arith.constant dense<0.000000e+00> : vector<64x256xf32>
    %2 = tpu.matmul %0, %1, %cst {dimension_numbers = #tpu.dot_dimension_numbers<[1], [0], [0], [1], [0, 0, 1, 1], [], []>} : vector<64x32xf32>, vector<32x256xf32>, vector<64x256xf32> -> vector<64x256xf32>
    %c0_3 = arith.constant 0 : index
    %c0_4 = arith.constant 0 : index
    %3 = vector.load %arg3[%c0_3, %c0_4] : memref<1x256xf32, #tpu.memory_space<vmem>>, vector<1x256xf32>
    %4 = vector.broadcast %3 : vector<1x256xf32> to vector<64x256xf32>
    %5 = arith.addf %2, %4 : vector<64x256xf32>
    %c0_5 = arith.constant 0 : index
    %c0_6 = arith.constant 0 : index
    %6 = vector.load %arg4[%c0_5, %c0_6] : memref<64x256xf32, #tpu.memory_space<vmem>>, vector<64x256xf32>
    tpu.vector_store %arg4[%c0_5, %c0_6], %5 {strides = array<i32>} : memref<64x256xf32, #tpu.memory_space<vmem>>, vector<64x256xf32>,
    return
  }
  func.func @transform_0(%arg0: i32) -> (i32, i32) {
    %c0_i32 = arith.constant 0 : i32
    %c0_i32_0 = arith.constant 0 : i32
    return %arg0, %c0_i32 : i32, i32
  }
  func.func @transform_1(%arg0: i32) -> (i32, i32) {
    %c0_i32 = arith.constant 0 : i32
    %c0_i32_0 = arith.constant 0 : i32
    %c0_i32_1 = arith.constant 0 : i32
    return %c0_i32, %c0_i32_0 : i32, i32
  }
  func.func @transform_2(%arg0: i32) -> (i32, i32) {
    %c0_i32 = arith.constant 0 : i32
    %c0_i32_0 = arith.constant 0 : i32
    %c0_i32_1 = arith.constant 0 : i32
    return %c0_i32, %c0_i32_0 : i32, i32
  }
  func.func @transform_3(%arg0: i32) -> (i32, i32) {
    %c0_i32 = arith.constant 0 : i32
    %c0_i32_0 = arith.constant 0 : i32
    return %arg0, %c0_i32 : i32, i32
  }
}

</mosaic_0001>

<llo_original>
// kernel: tpu_custom_call.1
$region0: #{tpu_custom_call.1}
  #allocation0 [shape = 'u32[]', space=smem, size = 0x4, offset = 0x4, fixed_abs, tag = 'smem constant byte address 0x4 - core index']
  #allocation1 [shape = 'u32[144,128]{1,0:T(1,128)}', space=vmem, size = 0x12000, scoped, tag = 'internal scratch']
  %s0 = inlined_call_operand.vmem [shape: f32[64,32], index: 0, kind: input, shape index: {}]
  %s1 = inlined_call_operand.vmem [shape: f32[32,256], index: 1, kind: input, shape index: {}]
  %s2 = inlined_call_operand.vmem [shape: f32[1,256], index: 2, kind: input, shape index: {}]
  %s3 = inlined_call_operand.hbm [shape: f32[64,256], index: 3, kind: output, shape index: {}]
  %s4 = sld [smem:[#allocation0]]
  $region22: #{tpu_custom_call.1} parent=0
    _
  %s6 = ssub.s32 1, %s4
  %s7 = scalar_select 0, %s6, %s4
  $region1: #{tpu_custom_call.1} parent=0
    #allocation2 [shape = 'u8[65536]{0}', space=vmem, size = 0x10000, scoped, tag = 'output window, operand 0, single buffered']
    #allocation3 [shape = 's32[1]{0}', space=sflag, size = 0x4, scoped, tag = 'scoped memory for tpu_custom_call.1']
    %8 = vsyncpa [#allocation3], 0
    // Predicated region
    $region2: #{tpu_custom_call.1} parent=1 // pred_check
      _
    $region3: #{tpu_custom_call.1} parent=1 // pred_check_branch
      %10 = sbr.rel (0) target = $region5
    $region4: #{tpu_custom_call.1} parent=1 // pred_region
      _
    $region5: #{tpu_custom_call.1} parent=1 // pred_fallthru
      _
    // Predicated region
    $region6: #{tpu_custom_call.1} parent=1 // pred_check
      _
    $region7: #{tpu_custom_call.1} parent=1 // pred_check_branch
      %12 = sbr.rel (0) target = $region9
    $region8: #{tpu_custom_call.1} parent=1 // pred_region
      _
    $region9: #{tpu_custom_call.1} parent=1 // pred_fallthru
      _
    // Predicated region
    $region10: #{tpu_custom_call.1} parent=1 // pred_check
      _
    $region11: #{tpu_custom_call.1} parent=1 // pred_check_branch
      %14 = sbr.rel (0) target = $region13
    $region12: #{tpu_custom_call.1} parent=1 // pred_region
      _
    $region13: #{tpu_custom_call.1} parent=1 // pred_fallthru
      _
    %v15 = vld [vmem:[%s0] sm:$0xff]
    %v16 = vld [vmem:[%s0 + $0x8] sm:$0xff]
    %v17 = vld [vmem:[%s0 + $0x10] sm:$0xff]
    %v18 = vld [vmem:[%s0 + $0x18] sm:$0xff]
    %v19 = vld [vmem:[%s0 + $0x20] sm:$0xff]
    %v20 = vld [vmem:[%s0 + $0x28] sm:$0xff]
    %v21 = vld [vmem:[%s0 + $0x30] sm:$0xff]
    %v22 = vld [vmem:[%s0 + $0x38] sm:$0xff]
    %v23 = vld [vmem:[%s1] sm:$0xff]
    %v24 = vld [vmem:[%s1 + $0x8] sm:$0xff]
    %v25 = vld [vmem:[%s1 + $0x10] sm:$0xff]
    %v26 = vld [vmem:[%s1 + $0x18] sm:$0xff]
    %v27 = vld [vmem:[%s1 + $0x20] sm:$0xff]
    %v28 = vld [vmem:[%s1 + $0x28] sm:$0xff]
    %v29 = vld [vmem:[%s1 + $0x30] sm:$0xff]
    %v30 = vld [vmem:[%s1 + $0x38] sm:$0xff]
    %v31 = vld [vmem:[%s2] sm:$0x3]
    %v33 = vlaneseq
    %v34 = vshrl.u32 %v33, 7
    %v35 = vsub.s32 0, %v34
    %v36 = vrot.slane %v31, %v35
    %v37 = vlaneseq
    %v38 = vshrl.u32 %v37, 7
    %v39 = vsub.s32 1, %v38
    %v40 = vrot.slane %v31, %v39
    %vm43 = vcmask 261120
    %v45 = vsel %vm43, %v15, 0
    %v48 = vsel %vm43, %v16, 0
    %v51 = vsel %vm43, %v17, 0
    %v54 = vsel %vm43, %v18, 0
    %v57 = vsel %vm43, %v19, 0
    %v60 = vsel %vm43, %v20, 0
    %v63 = vsel %vm43, %v21, 0
    %v66 = vsel %vm43, %v22, 0
    %68 = vmatprep.subr.mxu0 %v24
    %69 = vmatpush1.msra.mxu0 %v23
    %70 = vmatprep.subr.mxu0 %v26
    %71 = vmatpush1.msra.mxu0 %v25
    %72 = vmatprep.subr.mxu0 %v28
    %73 = vmatpush1.msra.mxu0 %v27
    %74 = vmatprep.subr.mxu0 %v30
    %75 = vmatpush1.msra.mxu0 %v29
    %76 = vmatprep.subr.mxu0 0.0
    %77 = vmatpush1.msra.mxu0 0.0
    %78 = vmatprep.subr.mxu0 0.0
    %79 = vmatpush1.msra.mxu0 0.0
    %80 = vmatprep.subr.mxu0 0.0
    %81 = vmatpush1.msra.mxu0 0.0
    %82 = vmatprep.subr.mxu0 0.0
    %83 = vmatpush1.msra.mxu0 0.0
    %84 = vmatprep.subr.mxu0 0.0
    %85 = vmatpush1.msra.mxu0 0.0
    %86 = vmatprep.subr.mxu0 0.0
    %87 = vmatpush1.msra.mxu0 0.0
    %88 = vmatprep.subr.mxu0 0.0
    %89 = vmatpush1.msra.mxu0 0.0
    %90 = vmatprep.subr.mxu0 0.0
    %91 = vmatpush1.msra.mxu0 0.0
    %92 = vmatprep.subr.mxu0 0.0
    %93 = vmatpush1.msra.mxu0 0.0
    %94 = vmatprep.subr.mxu0 0.0
    %95 = vmatpush1.msra.mxu0 0.0
    %96 = vmatprep.subr.mxu0 0.0
    %97 = vmatpush1.msra.mxu0 0.0
    %98 = vmatprep.subr.mxu0 0.0
    %99 = vmatpush1.msra.mxu0 0.0
    %100 = vmatprep.subr.mxu0 0.0
    %101 = vmatpush1.msra.mxu0 0.0
    %102 = vmatprep.subr.mxu0 0.0
    %103 = vmatpush1.msra.mxu0 0.0
    %104 = vmatprep.subr.mxu0 0.0
    %105 = vmatpush1.msra.mxu0 0.0
    %106 = vmatprep.subr.mxu0 0.0
    %107 = vmatpush1.msra.mxu0 0.0
    %108 = vmatprep.subr.mxu0 0.0
    %109 = vmatpush1.msra.mxu0 0.0
    %110 = vmatprep.subr.mxu0 0.0
    %111 = vmatpush1.msra.mxu0 0.0
    %112 = vmatprep.subr.mxu0 0.0
    %113 = vmatpush1.msra.mxu0 0.0
    %114 = vmatprep.subr.mxu0 0.0
    %115 = vmatpush1.msra.mxu0 0.0
    %116 = vmatprep.subr.mxu0 0.0
    %117 = vmatpush1.msra.mxu0 0.0
    %118 = vmatprep.subr.mxu0 0.0
    %119 = vmatpush1.msra.mxu0 0.0
    %120 = vmatprep.subr.mxu0 0.0
    %121 = vmatpush1.msra.mxu0 0.0
    %122 = vmatprep.subr.mxu0 0.0
    %123 = vmatpush1.msra.mxu0 0.0
    %124 = vmatprep.subr.mxu0 0.0
    %125 = vmatpush1.msra.mxu0 0.0
    %126 = vmatprep.subr.mxu0 0.0
    %127 = vmatpush1.msra.mxu0 0.0
    %128 = vmatprep.subr.mxu0 0.0
    %129 = vmatpush1.msra.mxu0 0.0
    %130 = vmatprep.subr.mxu0 0.0
    %131 = vmatpush1.msra.mxu0 0.0
    %132 = vmatprep.mubr.f32.mxu0 0.0
    %133 = vmatmul.mubr.f32.gmra.mrb[0].mxu0 %v45
    %v134 = vpop.f32.mrb[0].mxu0
    %v135 = vadd.f32 %v36, %v134
    %v136 = vpop.f32.mrb[0].mxu0
    %v137 = vadd.f32 %v40, %v136
    %138 = vmatprep.mubr.f32.mxu0 0.0
    %139 = vmatmul.mubr.f32.gmra.mrb[0].mxu0 %v48
    %v140 = vpop.f32.mrb[0].mxu0
    %v141 = vadd.f32 %v36, %v140
    %v142 = vpop.f32.mrb[0].mxu0
    %v143 = vadd.f32 %v40, %v142
    %144 = vmatprep.mubr.f32.mxu0 0.0
    %145 = vmatmul.mubr.f32.gmra.mrb[0].mxu0 %v51
    %v146 = vpop.f32.mrb[0].mxu0
    %v147 = vadd.f32 %v36, %v146
    %v148 = vpop.f32.mrb[0].mxu0
    %v149 = vadd.f32 %v40, %v148
    %150 = vmatprep.mubr.f32.mxu0 0.0
    %151 = vmatmul.mubr.f32.gmra.mrb[0].mxu0 %v54
    %v152 = vpop.f32.mrb[0].mxu0
    %v153 = vadd.f32 %v36, %v152
    %v154 = vpop.f32.mrb[0].mxu0
    %v155 = vadd.f32 %v40, %v154
    %156 = vmatprep.mubr.f32.mxu0 0.0
    %157 = vmatmul.mubr.f32.gmra.mrb[0].mxu0 %v57
    %v158 = vpop.f32.mrb[0].mxu0
    %v159 = vadd.f32 %v36, %v158
    %v160 = vpop.f32.mrb[0].mxu0
    %v161 = vadd.f32 %v40, %v160
    %162 = vmatprep.mubr.f32.mxu0 0.0
    %163 = vmatmul.mubr.f32.gmra.mrb[0].mxu0 %v60
    %v164 = vpop.f32.mrb[0].mxu0
    %v165 = vadd.f32 %v36, %v164
    %v166 = vpop.f32.mrb[0].mxu0
    %v167 = vadd.f32 %v40, %v166
    %168 = vmatprep.mubr.f32.mxu0 0.0
    %169 = vmatmul.mubr.f32.gmra.mrb[0].mxu0 %v63
    %v170 = vpop.f32.mrb[0].mxu0
    %v171 = vadd.f32 %v36, %v170
    %v172 = vpop.f32.mrb[0].mxu0
    %v173 = vadd.f32 %v40, %v172
    %174 = vmatprep.mubr.f32.mxu0 0.0
    %175 = vmatmul.mubr.f32.gmra.mrb[0].mxu0 %v66
    %v176 = vpop.f32.mrb[0].mxu0
    %v177 = vadd.f32 %v36, %v176
    %v178 = vpop.f32.mrb[0].mxu0
    %v179 = vadd.f32 %v40, %v178
    %180 = vdwg.mxu0
    %181 = vst [vmem:[#allocation2] sm:$0xff] %v135
    %182 = vst [vmem:[#allocation2 + $0x8] sm:$0xff] %v137
    %183 = vst [vmem:[#allocation2 + $0x10] sm:$0xff] %v141
    %184 = vst [vmem:[#allocation2 + $0x18] sm:$0xff] %v143
    %185 = vst [vmem:[#allocation2 + $0x20] sm:$0xff] %v147
    %186 = vst [vmem:[#allocation2 + $0x28] sm:$0xff] %v149
    %187 = vst [vmem:[#allocation2 + $0x30] sm:$0xff] %v153
    %188 = vst [vmem:[#allocation2 + $0x38] sm:$0xff] %v155
    %189 = vst [vmem:[#allocation2 + $0x40] sm:$0xff] %v159
    %190 = vst [vmem:[#allocation2 + $0x48] sm:$0xff] %v161
    %191 = vst [vmem:[#allocation2 + $0x50] sm:$0xff] %v165
    %192 = vst [vmem:[#allocation2 + $0x58] sm:$0xff] %v167
    %193 = vst [vmem:[#allocation2 + $0x60] sm:$0xff] %v171
    %194 = vst [vmem:[#allocation2 + $0x68] sm:$0xff] %v173
    %195 = vst [vmem:[#allocation2 + $0x70] sm:$0xff] %v177
    %196 = vst [vmem:[#allocation2 + $0x78] sm:$0xff] %v179
    // Predicated region
    $region14: #{tpu_custom_call.1} parent=1 // pred_check
      _
    $region15: #{tpu_custom_call.1} parent=1 // pred_check_branch
      %198 = sbr.rel (0) target = $region17
    $region16: #{tpu_custom_call.1} parent=1 // pred_region
      %s200 = ssub.s32 2048, 2048
      %201 = vsyncadd [#allocation3], %s200
      %s202 = sshll.u32 [#allocation2], 4
      %s203 = int_to_ptr.vmem [resolvable:$true] %s202
      %208 = dma.vmem_to_hbm [thread:$0]  %s203, 2048, %s3, [#allocation3], 256, 256, 16
    $region17: #{tpu_custom_call.1} parent=1 // pred_fallthru
      _
    // Predicated region
    $region18: #{tpu_custom_call.1} parent=1 // pred_check
      _
    $region19: #{tpu_custom_call.1} parent=1 // pred_check_branch
      %210 = sbr.rel (0) target = $region21
    $region20: #{tpu_custom_call.1} parent=1 // pred_region
      %211 = dma.done [#allocation3], 2048
    $region21: #{tpu_custom_call.1} parent=1 // pred_fallthru
      _
    %212 = vsyncpa [#allocation3], 1

</llo_original>
